<compile_context>
chip_gen: v5e
topology: v5e:2x2
jax: 0.10.0
libtpu: 0.0.40
codegen_flags: <defaults>
</compile_context>

<pallas_src>
import functools

import jax
import jax.numpy as jnp
from jax.experimental import pallas as pl
from jax.experimental.pallas import tpu as pltpu

LANE = 128          # lane width — pad narrow N/K dims up to this
SUBLANE = 8         # sublane granularity for the batch tile


def _round_up(x: int, m: int) -> int:
    return ((x + m - 1) // m) * m


def _mlp_kernel(x_ref, w1_ref, b1_ref, w2_ref, b2_ref, o_ref):
    # Linear 1 (MXU, bf16 in / f32 accumulate), bias + ReLU on the VPU.
    h = jnp.dot(x_ref[...], w1_ref[...], preferred_element_type=jnp.float32)
    h = jnp.maximum(h + b1_ref[...], 0.0)
    # Linear 2: cast the activation back to the weight dtype so the MXU runs
    # at native bf16 rate; accumulate in f32; lane-dense (padded) output store.
    o = jnp.dot(h.astype(w2_ref.dtype), w2_ref[...],
                preferred_element_type=jnp.float32)
    o_ref[...] = (o + b2_ref[...]).astype(o_ref.dtype)


@functools.partial(jax.jit, static_argnames=("block_rows", "use_bf16"))
def sequential_forward(x_nchw, w1, b1, w2, b2, *, block_rows=256, use_bf16=True):
    """Fused Flatten -> Linear -> ReLU -> Linear.

    x_nchw: (B, C, H, W) float32
    w1:     (C*H*W, hidden)   (transposed PyTorch weight)
    b1:     (hidden,)
    w2:     (hidden, out)
    b2:     (out,)
    returns (B, out) float32

    block_rows: batch-tile height for the grid (256 for v6e/v7x; prefer 128
    on v5e's 4x128 MXU). For tiny batches the tile shrinks to round_up(B, 8).
    """
    B = x_nchw.shape[0]
    in_features, hidden = w1.shape
    out_features = w2.shape[1]

    # Flatten(start_dim=1), row-major — identical to PyTorch on contiguous NCHW.
    x_flat = x_nchw.reshape(B, -1)

    compute_dtype = jnp.bfloat16 if use_bf16 else x_flat.dtype

    # ---- lane-dense padding of the narrow dims (hidden=32 -> 128, out=10 -> 128)
    hidden_p = _round_up(hidden, LANE)
    out_p = _round_up(out_features, LANE)

    w1_p = jnp.zeros((in_features, hidden_p), compute_dtype)
    w1_p = w1_p.at[:, :hidden].set(w1.astype(compute_dtype))
    b1_p = jnp.zeros((1, hidden_p), jnp.float32).at[:, :hidden].set(b1)

    w2_p = jnp.zeros((hidden_p, out_p), compute_dtype)
    w2_p = w2_p.at[:hidden, :out_features].set(w2.astype(compute_dtype))
    b2_p = jnp.zeros((1, out_p), jnp.float32).at[:, :out_features].set(b2)

    # ---- batch tiling: weight-stationary grid over batch tiles
    tm = min(block_rows, _round_up(B, SUBLANE))
    b_pad = _round_up(B, tm)
    x_p = jnp.zeros((b_pad, in_features), compute_dtype)
    x_p = x_p.at[:B].set(x_flat.astype(compute_dtype))

    n_tiles = b_pad // tm

    # Advisory cost estimate so XLA schedules the surrounding glue sensibly.
    itemsize = 2 if use_bf16 else 4
    cost = pl.CostEstimate(
        flops=2 * b_pad * (in_features * hidden_p + hidden_p * out_p),
        transcendentals=0,
        bytes_accessed=(b_pad * in_features * itemsize          # activations in
                        + in_features * hidden_p * itemsize     # W1
                        + hidden_p * out_p * itemsize           # W2
                        + (hidden_p + out_p) * 4                # biases
                        + b_pad * out_p * 4),                   # output
    )

    out_padded = pl.pallas_call(
        _mlp_kernel,
        out_shape=jax.ShapeDtypeStruct((b_pad, out_p), jnp.float32),
        grid=(n_tiles,),
        in_specs=[
            # activation tile streams over the batch (double-buffered)
            pl.BlockSpec((tm, in_features), lambda i: (i, 0)),
            # weights / biases: constant block index -> resident in VMEM
            pl.BlockSpec((in_features, hidden_p), lambda i: (0, 0)),
            pl.BlockSpec((1, hidden_p), lambda i: (0, 0)),
            pl.BlockSpec((hidden_p, out_p), lambda i: (0, 0)),
            pl.BlockSpec((1, out_p), lambda i: (0, 0)),
        ],
        out_specs=pl.BlockSpec((tm, out_p), lambda i: (i, 0)),
        compiler_params=pltpu.CompilerParams(
            dimension_semantics=("parallel",),   # megacore-shard batch tiles (v7x)
            vmem_limit_bytes=64 << 20,
        ),
        cost_estimate=cost,
    )(x_p, w1_p, b1_p, w2_p, b2_p)

    # Drop batch + lane padding (fused into the same jit, no extra HBM copy).
    return out_padded[:B, :out_features]


def init_linear_params(key, in_features, out_features):
    """PyTorch-style Linear init: U(-1/sqrt(in), 1/sqrt(in)).

    Returns W already transposed to (in, out) so the kernel can do x @ W.
    """
    k_w, k_b = jax.random.split(key)
    bound = 1.0 / jnp.sqrt(jnp.float32(in_features))
    w = jax.random.uniform(k_w, (in_features, out_features),
                           minval=-bound, maxval=bound, dtype=jnp.float32)
    b = jax.random.uniform(k_b, (out_features,),
                           minval=-bound, maxval=bound, dtype=jnp.float32)
    return w, b


if __name__ == "__main__":
    key = jax.random.PRNGKey(0)
    k_x, k_l1, k_l2 = jax.random.split(key, 3)

    # Small shapes consistent with the module's typical use.
    B, C, H, W = 2, 4, 16, 16
    in_features = C * H * W        # 1024
    hidden = 32
    out_features = 10

    x = jax.random.normal(k_x, (B, C, H, W), dtype=jnp.float32)
    w1, b1 = init_linear_params(k_l1, in_features, hidden)
    w2, b2 = init_linear_params(k_l2, hidden, out_features)

    out = sequential_forward(x, w1, b1, w2, b2)
    out = jax.block_until_ready(out)

    # Reference in plain JAX (same math as the PyTorch Sequential), f32.
    ref = x.reshape(B, -1) @ w1 + b1
    ref = jnp.maximum(ref, 0.0)
    ref = ref @ w2 + b2

    assert out.shape == (B, out_features)
    # bf16 compute path -> relaxed tolerance vs the f32 reference.
    assert jnp.allclose(out, ref, atol=2e-2, rtol=2e-2), (
        f"max abs err {jnp.max(jnp.abs(out - ref))}")

    print("KERNEL_OK")
</pallas_src>

<mosaic_0001>
module attributes {stable_mosaic.version = 11 : i64} {
  func.func @_mlp_kernel(%arg0: i32, %arg1: memref<8x1024xbf16, #tpu.memory_space<vmem>>, %arg2: memref<1024x128xbf16, #tpu.memory_space<vmem>>, %arg3: memref<1x128xf32, #tpu.memory_space<vmem>>, %arg4: memref<128x128xbf16, #tpu.memory_space<vmem>>, %arg5: memref<1x128xf32, #tpu.memory_space<vmem>>, %arg6: memref<8x128xf32, #tpu.memory_space<vmem>>) attributes {dimension_semantics = [#tpu.dimension_semantics<parallel>], iteration_bounds = array<i64: 1>, scalar_prefetch = 0 : i64, scratch_operands = 0 : i64, tpu.core_type = #tpu.core_type<tc>, window_params = [{transform_indices = @transform_0, window_bounds = array<i64: 8, 1024>}, {pipeline_mode = #tpu.pipeline_mode<synchronous>, transform_indices = @transform_1, window_bounds = array<i64: 1024, 128>}, {pipeline_mode = #tpu.pipeline_mode<synchronous>, transform_indices = @transform_2, window_bounds = array<i64: 1, 128>}, {pipeline_mode = #tpu.pipeline_mode<synchronous>, transform_indices = @transform_3, window_bounds = array<i64: 128, 128>}, {pipeline_mode = #tpu.pipeline_mode<synchronous>, transform_indices = @transform_4, window_bounds = array<i64: 1, 128>}, {transform_indices = @transform_5, window_bounds = array<i64: 8, 128>}]} {
    %c0 = arith.constant 0 : index
    %c0_0 = arith.constant 0 : index
    %0 = vector.load %arg1[%c0, %c0_0] : memref<8x1024xbf16, #tpu.memory_space<vmem>>, vector<8x1024xbf16>
    %c0_1 = arith.constant 0 : index
    %c0_2 = arith.constant 0 : index
    %1 = vector.load %arg2[%c0_1, %c0_2] : memref<1024x128xbf16, #tpu.memory_space<vmem>>, vector<1024x128xbf16>
    %cst = arith.constant dense<0.000000e+00> : vector<8x128xf32>
    %2 = tpu.matmul %0, %1, %cst {dimension_numbers = #tpu.dot_dimension_numbers<[1], [0], [0], [1], [0, 0, 1, 1], [], []>} : vector<8x1024xbf16>, vector<1024x128xbf16>, vector<8x128xf32> -> vector<8x128xf32>
    %c0_3 = arith.constant 0 : index
    %c0_4 = arith.constant 0 : index
    %3 = vector.load %arg3[%c0_3, %c0_4] : memref<1x128xf32, #tpu.memory_space<vmem>>, vector<1x128xf32>
    %4 = vector.broadcast %3 : vector<1x128xf32> to vector<8x128xf32>
    %5 = arith.addf %2, %4 : vector<8x128xf32>
    %cst_5 = arith.constant 0.000000e+00 : f32
    %6 = vector.broadcast %cst_5 : f32 to vector<8x128xf32>
    %7 = arith.maximumf %5, %6 : vector<8x128xf32>
    %8 = arith.truncf %7 : vector<8x128xf32> to vector<8x128xbf16>
    %c0_6 = arith.constant 0 : index
    %c0_7 = arith.constant 0 : index
    %9 = vector.load %arg4[%c0_6, %c0_7] : memref<128x128xbf16, #tpu.memory_space<vmem>>, vector<128x128xbf16>
    %cst_8 = arith.constant dense<0.000000e+00> : vector<8x128xf32>
    %10 = tpu.matmul %8, %9, %cst_8 {dimension_numbers = #tpu.dot_dimension_numbers<[1], [0], [0], [1], [0, 0, 1, 1], [], []>} : vector<8x128xbf16>, vector<128x128xbf16>, vector<8x128xf32> -> vector<8x128xf32>
    %c0_9 = arith.constant 0 : index
    %c0_10 = arith.constant 0 : index
    %11 = vector.load %arg5[%c0_9, %c0_10] : memref<1x128xf32, #tpu.memory_space<vmem>>, vector<1x128xf32>
    %12 = vector.broadcast %11 : vector<1x128xf32> to vector<8x128xf32>
    %13 = arith.addf %10, %12 : vector<8x128xf32>
    %c0_11 = arith.constant 0 : index
    %c0_12 = arith.constant 0 : index
    %14 = vector.load %arg6[%c0_11, %c0_12] : memref<8x128xf32, #tpu.memory_space<vmem>>, vector<8x128xf32>
    tpu.vector_store %arg6[%c0_11, %c0_12], %13 {strides = array<i32>} : memref<8x128xf32, #tpu.memory_space<vmem>>, vector<8x128xf32>,
    return
  }
  func.func @transform_0(%arg0: i32) -> (i32, i32) {
    %c0_i32 = arith.constant 0 : i32
    %c0_i32_0 = arith.constant 0 : i32
    return %arg0, %c0_i32 : i32, i32
  }
  func.func @transform_1(%arg0: i32) -> (i32, i32) {
    %c0_i32 = arith.constant 0 : i32
    %c0_i32_0 = arith.constant 0 : i32
    %c0_i32_1 = arith.constant 0 : i32
    return %c0_i32, %c0_i32_0 : i32, i32
  }
  func.func @transform_2(%arg0: i32) -> (i32, i32) {
    %c0_i32 = arith.constant 0 : i32
    %c0_i32_0 = arith.constant 0 : i32
    %c0_i32_1 = arith.constant 0 : i32
    return %c0_i32, %c0_i32_0 : i32, i32
  }
  func.func @transform_3(%arg0: i32) -> (i32, i32) {
    %c0_i32 = arith.constant 0 : i32
    %c0_i32_0 = arith.constant 0 : i32
    %c0_i32_1 = arith.constant 0 : i32
    return %c0_i32, %c0_i32_0 : i32, i32
  }
  func.func @transform_4(%arg0: i32) -> (i32, i32) {
    %c0_i32 = arith.constant 0 : i32
    %c0_i32_0 = arith.constant 0 : i32
    %c0_i32_1 = arith.constant 0 : i32
    return %c0_i32, %c0_i32_0 : i32, i32
  }
  func.func @transform_5(%arg0: i32) -> (i32, i32) {
    %c0_i32 = arith.constant 0 : i32
    %c0_i32_0 = arith.constant 0 : i32
    return %arg0, %c0_i32 : i32, i32
  }
}

</mosaic_0001>

<llo_original>
// kernel: sequential_forward.1
$region0: #{sequential_forward.1}
  #allocation0 [shape = 'u32[]', space=smem, size = 0x4, offset = 0x4, fixed_abs, tag = 'smem constant byte address 0x4 - core index']
  #allocation1 [shape = 'u32[72,128]{1,0:T(1,128)}', space=vmem, size = 0x9000, scoped, tag = 'internal scratch']
  %s0 = inlined_call_operand.vmem [shape: bf16[8,1024], index: 0, kind: input, shape index: {}]
  %s1 = inlined_call_operand.vmem [shape: bf16[1024,128], index: 1, kind: input, shape index: {}]
  %s2 = inlined_call_operand.vmem [shape: f32[1,128], index: 2, kind: input, shape index: {}]
  %s3 = inlined_call_operand.vmem [shape: bf16[128,128], index: 3, kind: input, shape index: {}]
  %s4 = inlined_call_operand.vmem [shape: f32[1,128], index: 4, kind: input, shape index: {}]
  %s5 = inlined_call_operand.vmem [shape: f32[8,128], index: 5, kind: output, shape index: {}]
  %s6 = sld [smem:[#allocation0]]
  $region30: #{sequential_forward.1} parent=0
    _
  %s8 = ssub.s32 1, %s6
  %s9 = scalar_select 0, %s8, %s6
  // Predicated region
  $region2: #{sequential_forward.1} parent=0 // pred_check
    _
  $region3: #{sequential_forward.1} parent=0 // pred_check_branch
    %11 = sbr.rel (0) target = $region5
  $region4: #{sequential_forward.1} parent=0 // pred_region
    _
  $region5: #{sequential_forward.1} parent=0 // pred_fallthru
    _
  // Predicated region
  $region6: #{sequential_forward.1} parent=0 // pred_check
    _
  $region7: #{sequential_forward.1} parent=0 // pred_check_branch
    %13 = sbr.rel (0) target = $region9
  $region8: #{sequential_forward.1} parent=0 // pred_region
    _
  $region9: #{sequential_forward.1} parent=0 // pred_fallthru
    _
  // Predicated region
  $region10: #{sequential_forward.1} parent=0 // pred_check
    _
  $region11: #{sequential_forward.1} parent=0 // pred_check_branch
    %15 = sbr.rel (0) target = $region13
  $region12: #{sequential_forward.1} parent=0 // pred_region
    _
  $region13: #{sequential_forward.1} parent=0 // pred_fallthru
    _
  // Predicated region
  $region14: #{sequential_forward.1} parent=0 // pred_check
    _
  $region15: #{sequential_forward.1} parent=0 // pred_check_branch
    %17 = sbr.rel (0) target = $region17
  $region16: #{sequential_forward.1} parent=0 // pred_region
    _
  $region17: #{sequential_forward.1} parent=0 // pred_fallthru
    _
  // Predicated region
  $region18: #{sequential_forward.1} parent=0 // pred_check
    _
  $region19: #{sequential_forward.1} parent=0 // pred_check_branch
    %19 = sbr.rel (0) target = $region21
  $region20: #{sequential_forward.1} parent=0 // pred_region
    _
  $region21: #{sequential_forward.1} parent=0 // pred_fallthru
    _
  %v20 = vld [vmem:[%s0] sm:$0xff]
  %v21 = vld [vmem:[%s0 + $0x8] sm:$0xff]
  %v22 = vld [vmem:[%s0 + $0x10] sm:$0xff]
  %v23 = vld [vmem:[%s0 + $0x18] sm:$0xff]
  %v24 = vld [vmem:[%s1] sm:$0xf]
  %v25 = vld [vmem:[%s1 + $0x4] sm:$0xf]
  %v26 = vld [vmem:[%s1 + $0x8] sm:$0xf]
  %v27 = vld [vmem:[%s1 + $0xc] sm:$0xf]
  %v28 = vld [vmem:[%s1 + $0x10] sm:$0xf]
  %v29 = vld [vmem:[%s1 + $0x14] sm:$0xf]
  %v30 = vld [vmem:[%s1 + $0x18] sm:$0xf]
  %v31 = vld [vmem:[%s1 + $0x1c] sm:$0xf]
  %v32 = vld [vmem:[%s1 + $0x20] sm:$0xf]
  %v33 = vld [vmem:[%s1 + $0x24] sm:$0xf]
  %v34 = vld [vmem:[%s1 + $0x28] sm:$0xf]
  %v35 = vld [vmem:[%s1 + $0x2c] sm:$0xf]
  %v36 = vld [vmem:[%s1 + $0x30] sm:$0xf]
  %v37 = vld [vmem:[%s1 + $0x34] sm:$0xf]
  %v38 = vld [vmem:[%s1 + $0x38] sm:$0xf]
  %v39 = vld [vmem:[%s1 + $0x3c] sm:$0xf]
  %v40 = vld [vmem:[%s1 + $0x40] sm:$0xf]
  %v41 = vld [vmem:[%s1 + $0x44] sm:$0xf]
  %v42 = vld [vmem:[%s1 + $0x48] sm:$0xf]
  %v43 = vld [vmem:[%s1 + $0x4c] sm:$0xf]
  %v44 = vld [vmem:[%s1 + $0x50] sm:$0xf]
  %v45 = vld [vmem:[%s1 + $0x54] sm:$0xf]
  %v46 = vld [vmem:[%s1 + $0x58] sm:$0xf]
  %v47 = vld [vmem:[%s1 + $0x5c] sm:$0xf]
  %v48 = vld [vmem:[%s1 + $0x60] sm:$0xf]
  %v49 = vld [vmem:[%s1 + $0x64] sm:$0xf]
  %v50 = vld [vmem:[%s1 + $0x68] sm:$0xf]
  %v51 = vld [vmem:[%s1 + $0x6c] sm:$0xf]
  %v52 = vld [vmem:[%s1 + $0x70] sm:$0xf]
  %v53 = vld [vmem:[%s1 + $0x74] sm:$0xf]
  %v54 = vld [vmem:[%s1 + $0x78] sm:$0xf]
  %v55 = vld [vmem:[%s1 + $0x7c] sm:$0xf]
  %v56 = vld [vmem:[%s1 + $0x80] sm:$0xf]
  %v57 = vld [vmem:[%s1 + $0x84] sm:$0xf]
  %v58 = vld [vmem:[%s1 + $0x88] sm:$0xf]
  %v59 = vld [vmem:[%s1 + $0x8c] sm:$0xf]
  %v60 = vld [vmem:[%s1 + $0x90] sm:$0xf]
  %v61 = vld [vmem:[%s1 + $0x94] sm:$0xf]
  %v62 = vld [vmem:[%s1 + $0x98] sm:$0xf]
  %v63 = vld [vmem:[%s1 + $0x9c] sm:$0xf]
  %v64 = vld [vmem:[%s1 + $0xa0] sm:$0xf]
  %v65 = vld [vmem:[%s1 + $0xa4] sm:$0xf]
  %v66 = vld [vmem:[%s1 + $0xa8] sm:$0xf]
  %v67 = vld [vmem:[%s1 + $0xac] sm:$0xf]
  %v68 = vld [vmem:[%s1 + $0xb0] sm:$0xf]
  %v69 = vld [vmem:[%s1 + $0xb4] sm:$0xf]
  %v70 = vld [vmem:[%s1 + $0xb8] sm:$0xf]
  %v71 = vld [vmem:[%s1 + $0xbc] sm:$0xf]
  %v72 = vld [vmem:[%s1 + $0xc0] sm:$0xf]
  %v73 = vld [vmem:[%s1 + $0xc4] sm:$0xf]
  %v74 = vld [vmem:[%s1 + $0xc8] sm:$0xf]
  %v75 = vld [vmem:[%s1 + $0xcc] sm:$0xf]
  %v76 = vld [vmem:[%s1 + $0xd0] sm:$0xf]
  %v77 = vld [vmem:[%s1 + $0xd4] sm:$0xf]
  %v78 = vld [vmem:[%s1 + $0xd8] sm:$0xf]
  %v79 = vld [vmem:[%s1 + $0xdc] sm:$0xf]
  %v80 = vld [vmem:[%s1 + $0xe0] sm:$0xf]
  %v81 = vld [vmem:[%s1 + $0xe4] sm:$0xf]
  %v82 = vld [vmem:[%s1 + $0xe8] sm:$0xf]
  %v83 = vld [vmem:[%s1 + $0xec] sm:$0xf]
  %v84 = vld [vmem:[%s1 + $0xf0] sm:$0xf]
  %v85 = vld [vmem:[%s1 + $0xf4] sm:$0xf]
  %v86 = vld [vmem:[%s1 + $0xf8] sm:$0xf]
  %v87 = vld [vmem:[%s1 + $0xfc] sm:$0xf]
  %v88 = vld [vmem:[%s1 + $0x100] sm:$0xf]
  %v89 = vld [vmem:[%s1 + $0x104] sm:$0xf]
  %v90 = vld [vmem:[%s1 + $0x108] sm:$0xf]
  %v91 = vld [vmem:[%s1 + $0x10c] sm:$0xf]
  %v92 = vld [vmem:[%s1 + $0x110] sm:$0xf]
  %v93 = vld [vmem:[%s1 + $0x114] sm:$0xf]
  %v94 = vld [vmem:[%s1 + $0x118] sm:$0xf]
  %v95 = vld [vmem:[%s1 + $0x11c] sm:$0xf]
  %v96 = vld [vmem:[%s1 + $0x120] sm:$0xf]
  %v97 = vld [vmem:[%s1 + $0x124] sm:$0xf]
  %v98 = vld [vmem:[%s1 + $0x128] sm:$0xf]
  %v99 = vld [vmem:[%s1 + $0x12c] sm:$0xf]
  %v100 = vld [vmem:[%s1 + $0x130] sm:$0xf]
  %v101 = vld [vmem:[%s1 + $0x134] sm:$0xf]
  %v102 = vld [vmem:[%s1 + $0x138] sm:$0xf]
  %v103 = vld [vmem:[%s1 + $0x13c] sm:$0xf]
  %v104 = vld [vmem:[%s1 + $0x140] sm:$0xf]
  %v105 = vld [vmem:[%s1 + $0x144] sm:$0xf]
  %v106 = vld [vmem:[%s1 + $0x148] sm:$0xf]
  %v107 = vld [vmem:[%s1 + $0x14c] sm:$0xf]
  %v108 = vld [vmem:[%s1 + $0x150] sm:$0xf]
  %v109 = vld [vmem:[%s1 + $0x154] sm:$0xf]
  %v110 = vld [vmem:[%s1 + $0x158] sm:$0xf]
  %v111 = vld [vmem:[%s1 + $0x15c] sm:$0xf]
  %v112 = vld [vmem:[%s1 + $0x160] sm:$0xf]
  %v113 = vld [vmem:[%s1 + $0x164] sm:$0xf]
  %v114 = vld [vmem:[%s1 + $0x168] sm:$0xf]
  %v115 = vld [vmem:[%s1 + $0x16c] sm:$0xf]
  %v116 = vld [vmem:[%s1 + $0x170] sm:$0xf]
  %v117 = vld [vmem:[%s1 + $0x174] sm:$0xf]
  %v118 = vld [vmem:[%s1 + $0x178] sm:$0xf]
  %v119 = vld [vmem:[%s1 + $0x17c] sm:$0xf]
  %v120 = vld [vmem:[%s1 + $0x180] sm:$0xf]
  %v121 = vld [vmem:[%s1 + $0x184] sm:$0xf]
  %v122 = vld [vmem:[%s1 + $0x188] sm:$0xf]
  %v123 = vld [vmem:[%s1 + $0x18c] sm:$0xf]
  %v124 = vld [vmem:[%s1 + $0x190] sm:$0xf]
  %v125 = vld [vmem:[%s1 + $0x194] sm:$0xf]
  %v126 = vld [vmem:[%s1 + $0x198] sm:$0xf]
  %v127 = vld [vmem:[%s1 + $0x19c] sm:$0xf]
  %v128 = vld [vmem:[%s1 + $0x1a0] sm:$0xf]
  %v129 = vld [vmem:[%s1 + $0x1a4] sm:$0xf]
  %v130 = vld [vmem:[%s1 + $0x1a8] sm:$0xf]
  %v131 = vld [vmem:[%s1 + $0x1ac] sm:$0xf]
  %v132 = vld [vmem:[%s1 + $0x1b0] sm:$0xf]
  %v133 = vld [vmem:[%s1 + $0x1b4] sm:$0xf]
  %v134 = vld [vmem:[%s1 + $0x1b8] sm:$0xf]
  %v135 = vld [vmem:[%s1 + $0x1bc] sm:$0xf]
  %v136 = vld [vmem:[%s1 + $0x1c0] sm:$0xf]
  %v137 = vld [vmem:[%s1 + $0x1c4] sm:$0xf]
  %v138 = vld [vmem:[%s1 + $0x1c8] sm:$0xf]
  %v139 = vld [vmem:[%s1 + $0x1cc] sm:$0xf]
  %v140 = vld [vmem:[%s1 + $0x1d0] sm:$0xf]
  %v141 = vld [vmem:[%s1 + $0x1d4] sm:$0xf]
  %v142 = vld [vmem:[%s1 + $0x1d8] sm:$0xf]
  %v143 = vld [vmem:[%s1 + $0x1dc] sm:$0xf]
  %v144 = vld [vmem:[%s1 + $0x1e0] sm:$0xf]
  %v145 = vld [vmem:[%s1 + $0x1e4] sm:$0xf]
  %v146 = vld [vmem:[%s1 + $0x1e8] sm:$0xf]
  %v147 = vld [vmem:[%s1 + $0x1ec] sm:$0xf]
  %v148 = vld [vmem:[%s1 + $0x1f0] sm:$0xf]
  %v149 = vld [vmem:[%s1 + $0x1f4] sm:$0xf]
  %v150 = vld [vmem:[%s1 + $0x1f8] sm:$0xf]
  %v151 = vld [vmem:[%s1 + $0x1fc] sm:$0xf]
  %v152 = vld [vmem:[%s2] sm:$0x1]
  %v154 = vperm.slane %v152, 0
  %v160 = vunpack.c.l.b16 %v20
  %v161 = vunpack.c.h.b16 %v20
  %v162 = vunpack.c.l.b16 %v21
  %v163 = vunpack.c.h.b16 %v21
  %v164 = vunpack.c.l.b16 %v22
  %v165 = vunpack.c.h.b16 %v22
  %v166 = vunpack.c.l.b16 %v23
  %v167 = vunpack.c.h.b16 %v23
  %v168 = vpack.c.b16 %v160, %v160
  %v169 = vpack.c.b16 %v161, %v161
  %v170 = vpack.c.b16 %v162, %v162
  %v171 = vpack.c.b16 %v163, %v163
  %v172 = vpack.c.b16 %v164, %v164
  %v173 = vpack.c.b16 %v165, %v165
  %v174 = vpack.c.b16 %v166, %v166
  %v175 = vpack.c.b16 %v167, %v167
  %v312 = vunpack.c.l.b16 %v24
  %v313 = vunpack.c.l.b16 %v25
  %v314 = vunpack.c.l.b16 %v26
  %v315 = vunpack.c.l.b16 %v27
  %v316 = vunpack.c.l.b16 %v28
  %v317 = vunpack.c.l.b16 %v29
  %v318 = vunpack.c.l.b16 %v30
  %v319 = vunpack.c.l.b16 %v31
  %v320 = vunpack.c.l.b16 %v32
  %v321 = vunpack.c.l.b16 %v33
  %v322 = vunpack.c.l.b16 %v34
  %v323 = vunpack.c.l.b16 %v35
  %v324 = vunpack.c.l.b16 %v36
  %v325 = vunpack.c.l.b16 %v37
  %v326 = vunpack.c.l.b16 %v38
  %v327 = vunpack.c.l.b16 %v39
  %v328 = vunpack.c.l.b16 %v40
  %v329 = vunpack.c.l.b16 %v41
  %v330 = vunpack.c.l.b16 %v42
  %v331 = vunpack.c.l.b16 %v43
  %v332 = vunpack.c.l.b16 %v44
  %v333 = vunpack.c.l.b16 %v45
  %v334 = vunpack.c.l.b16 %v46
  %v335 = vunpack.c.l.b16 %v47
  %v336 = vunpack.c.l.b16 %v48
  %v337 = vunpack.c.l.b16 %v49
  %v338 = vunpack.c.l.b16 %v50
  %v339 = vunpack.c.l.b16 %v51
  %v340 = vunpack.c.l.b16 %v52
  %v341 = vunpack.c.l.b16 %v53
  %v342 = vunpack.c.l.b16 %v54
  %v343 = vunpack.c.l.b16 %v55
  %v344 = vunpack.c.l.b16 %v56
  %v345 = vunpack.c.l.b16 %v57
  %v346 = vunpack.c.l.b16 %v58
  %v347 = vunpack.c.l.b16 %v59
  %v348 = vunpack.c.l.b16 %v60
  %v349 = vunpack.c.l.b16 %v61
  %v350 = vunpack.c.l.b16 %v62
  %v351 = vunpack.c.l.b16 %v63
  %v352 = vunpack.c.l.b16 %v64
  %v353 = vunpack.c.l.b16 %v65
  %v354 = vunpack.c.l.b16 %v66
  %v355 = vunpack.c.l.b16 %v67
  %v356 = vunpack.c.l.b16 %v68
  %v357 = vunpack.c.l.b16 %v69
  %v358 = vunpack.c.l.b16 %v70
  %v359 = vunpack.c.l.b16 %v71
  %v360 = vunpack.c.l.b16 %v72
  %v361 = vunpack.c.l.b16 %v73
  %v362 = vunpack.c.l.b16 %v74
  %v363 = vunpack.c.l.b16 %v75
  %v364 = vunpack.c.l.b16 %v76
  %v365 = vunpack.c.l.b16 %v77
  %v366 = vunpack.c.l.b16 %v78
  %v367 = vunpack.c.l.b16 %v79
  %v368 = vunpack.c.l.b16 %v80
  %v369 = vunpack.c.l.b16 %v81
  %v370 = vunpack.c.l.b16 %v82
  %v371 = vunpack.c.l.b16 %v83
  %v372 = vunpack.c.l.b16 %v84
  %v373 = vunpack.c.l.b16 %v85
  %v374 = vunpack.c.l.b16 %v86
  %v375 = vunpack.c.l.b16 %v87
  %v376 = vunpack.c.l.b16 %v88
  %v377 = vunpack.c.l.b16 %v89
  %v378 = vunpack.c.l.b16 %v90
  %v379 = vunpack.c.l.b16 %v91
  %v380 = vunpack.c.l.b16 %v92
  %v381 = vunpack.c.l.b16 %v93
  %v382 = vunpack.c.l.b16 %v94
  %v383 = vunpack.c.l.b16 %v95
  %v384 = vunpack.c.l.b16 %v96
  %v385 = vunpack.c.l.b16 %v97
  %v386 = vunpack.c.l.b16 %v98
  %v387 = vunpack.c.l.b16 %v99
  %v388 = vunpack.c.l.b16 %v100
  %v389 = vunpack.c.l.b16 %v101
  %v390 = vunpack.c.l.b16 %v102
  %v391 = vunpack.c.l.b16 %v103
  %v392 = vunpack.c.l.b16 %v104
  %v393 = vunpack.c.l.b16 %v105
  %v394 = vunpack.c.l.b16 %v106
  %v395 = vunpack.c.l.b16 %v107
  %v396 = vunpack.c.l.b16 %v108
  %v397 = vunpack.c.l.b16 %v109
  %v398 = vunpack.c.l.b16 %v110
  %v399 = vunpack.c.l.b16 %v111
  %v400 = vunpack.c.l.b16 %v112
  %v401 = vunpack.c.l.b16 %v113
  %v402 = vunpack.c.l.b16 %v114
  %v403 = vunpack.c.l.b16 %v115
  %v404 = vunpack.c.l.b16 %v116
  %v405 = vunpack.c.l.b16 %v117
  %v406 = vunpack.c.l.b16 %v118
  %v407 = vunpack.c.l.b16 %v119
  %v408 = vunpack.c.l.b16 %v120
  %v409 = vunpack.c.l.b16 %v121
  %v410 = vunpack.c.l.b16 %v122
  %v411 = vunpack.c.l.b16 %v123
  %v412 = vunpack.c.l.b16 %v124
  %v413 = vunpack.c.l.b16 %v125
  %v414 = vunpack.c.l.b16 %v126
  %v415 = vunpack.c.l.b16 %v127
  %v416 = vunpack.c.l.b16 %v128
  %v417 = vunpack.c.l.b16 %v129
  %v418 = vunpack.c.l.b16 %v130
  %v419 = vunpack.c.l.b16 %v131
  %v420 = vunpack.c.l.b16 %v132
  %v421 = vunpack.c.l.b16 %v133
  %v422 = vunpack.c.l.b16 %v134
  %v423 = vunpack.c.l.b16 %v135
  %v424 = vunpack.c.l.b16 %v136
  %v425 = vunpack.c.l.b16 %v137
  %v426 = vunpack.c.l.b16 %v138
  %v427 = vunpack.c.l.b16 %v139
  %v428 = vunpack.c.l.b16 %v140
  %v429 = vunpack.c.l.b16 %v141
  %v430 = vunpack.c.l.b16 %v142
  %v431 = vunpack.c.l.b16 %v143
  %v432 = vunpack.c.l.b16 %v144
  %v433 = vunpack.c.l.b16 %v145
  %v434 = vunpack.c.l.b16 %v146
  %v435 = vunpack.c.l.b16 %v147
  %v436 = vunpack.c.l.b16 %v148
  %v437 = vunpack.c.l.b16 %v149
  %v438 = vunpack.c.l.b16 %v150
  %v439 = vunpack.c.l.b16 %v151
  %v440 = vpack.c.b16 %v313, %v312
  %v441 = vpack.c.b16 %v315, %v314
  %v442 = vpack.c.b16 %v317, %v316
  %v443 = vpack.c.b16 %v319, %v318
  %v444 = vpack.c.b16 %v321, %v320
  %v445 = vpack.c.b16 %v323, %v322
  %v446 = vpack.c.b16 %v325, %v324
  %v447 = vpack.c.b16 %v327, %v326
  %v448 = vpack.c.b16 %v329, %v328
  %v449 = vpack.c.b16 %v331, %v330
  %v450 = vpack.c.b16 %v333, %v332
  %v451 = vpack.c.b16 %v335, %v334
  %v452 = vpack.c.b16 %v337, %v336
  %v453 = vpack.c.b16 %v339, %v338
  %v454 = vpack.c.b16 %v341, %v340
  %v455 = vpack.c.b16 %v343, %v342
  %v456 = vpack.c.b16 %v345, %v344
  %v457 = vpack.c.b16 %v347, %v346
  %v458 = vpack.c.b16 %v349, %v348
  %v459 = vpack.c.b16 %v351, %v350
  %v460 = vpack.c.b16 %v353, %v352
  %v461 = vpack.c.b16 %v355, %v354
  %v462 = vpack.c.b16 %v357, %v356
  %v463 = vpack.c.b16 %v359, %v358
  %v464 = vpack.c.b16 %v361, %v360
  %v465 = vpack.c.b16 %v363, %v362
  %v466 = vpack.c.b16 %v365, %v364
  %v467 = vpack.c.b16 %v367, %v366
  %v468 = vpack.c.b16 %v369, %v368
  %v469 = vpack.c.b16 %v371, %v370
  %v470 = vpack.c.b16 %v373, %v372
  %v471 = vpack.c.b16 %v375, %v374
  %v472 = vpack.c.b16 %v377, %v376
  %v473 = vpack.c.b16 %v379, %v378
  %v474 = vpack.c.b16 %v381, %v380
  %v475 = vpack.c.b16 %v383, %v382
  %v476 = vpack.c.b16 %v385, %v384
  %v477 = vpack.c.b16 %v387, %v386
  %v478 = vpack.c.b16 %v389, %v388
  %v479 = vpack.c.b16 %v391, %v390
  %v480 = vpack.c.b16 %v393, %v392
  %v481 = vpack.c.b16 %v395, %v394
  %v482 = vpack.c.b16 %v397, %v396
  %v483 = vpack.c.b16 %v399, %v398
  %v484 = vpack.c.b16 %v401, %v400
  %v485 = vpack.c.b16 %v403, %v402
  %v486 = vpack.c.b16 %v405, %v404
  %v487 = vpack.c.b16 %v407, %v406
  %v488 = vpack.c.b16 %v409, %v408
  %v489 = vpack.c.b16 %v411, %v410
  %v490 = vpack.c.b16 %v413, %v412
  %v491 = vpack.c.b16 %v415, %v414
  %v492 = vpack.c.b16 %v417, %v416
  %v493 = vpack.c.b16 %v419, %v418
  %v494 = vpack.c.b16 %v421, %v420
  %v495 = vpack.c.b16 %v423, %v422
  %v496 = vpack.c.b16 %v425, %v424
  %v497 = vpack.c.b16 %v427, %v426
  %v498 = vpack.c.b16 %v429, %v428
  %v499 = vpack.c.b16 %v431, %v430
  %v500 = vpack.c.b16 %v433, %v432
  %v501 = vpack.c.b16 %v435, %v434
  %v502 = vpack.c.b16 %v437, %v436
  %v503 = vpack.c.b16 %v439, %v438
  %568 = vmatpush.bf16.msra.mxu0 %v447
  %569 = vmatpush.bf16.msra.mxu0 %v446
  %570 = vmatpush.bf16.msra.mxu0 %v445
  %571 = vmatpush.bf16.msra.mxu0 %v444
  %572 = vmatpush.bf16.msra.mxu0 %v443
  %573 = vmatpush.bf16.msra.mxu0 %v442
  %574 = vmatpush.bf16.msra.mxu0 %v441
  %575 = vmatpush.bf16.msra.mxu0 %v440
  %576 = vmatmul.bf16.gmra.mxu0 %v168
  %v577 = vpop.f32.mrf.mxu0
  %v578 = vadd.f32 %v154, %v577
  %v579 = vpop.f32.mrf.mxu0
  %580 = vdwg.mxu0
  %581 = vmatpush.bf16.msra.mxu0 %v455
  %582 = vmatpush.bf16.msra.mxu0 %v454
  %583 = vmatpush.bf16.msra.mxu0 %v453
  %584 = vmatpush.bf16.msra.mxu0 %v452
  %585 = vmatpush.bf16.msra.mxu0 %v451
  %586 = vmatpush.bf16.msra.mxu0 %v450
  %587 = vmatpush.bf16.msra.mxu0 %v449
  %588 = vmatpush.bf16.msra.mxu0 %v448
  %589 = vmatmul.bf16.gmra.mxu0 %v169
  %v590 = vpop.f32.mrf.mxu0
  %v591 = vadd.f32 %v578, %v590
  %v592 = vpop.f32.mrf.mxu0
  %593 = vdwg.mxu0
  %594 = vmatpush.bf16.msra.mxu0 %v463
  %595 = vmatpush.bf16.msra.mxu0 %v462
  %596 = vmatpush.bf16.msra.mxu0 %v461
  %597 = vmatpush.bf16.msra.mxu0 %v460
  %598 = vmatpush.bf16.msra.mxu0 %v459
  %599 = vmatpush.bf16.msra.mxu0 %v458
  %600 = vmatpush.bf16.msra.mxu0 %v457
  %601 = vmatpush.bf16.msra.mxu0 %v456
  %602 = vmatmul.bf16.gmra.mxu0 %v170
  %v603 = vpop.f32.mrf.mxu0
  %v604 = vadd.f32 %v591, %v603
  %v605 = vpop.f32.mrf.mxu0
  %606 = vdwg.mxu0
  %607 = vmatpush.bf16.msra.mxu0 %v471
  %608 = vmatpush.bf16.msra.mxu0 %v470
  %609 = vmatpush.bf16.msra.mxu0 %v469
  %610 = vmatpush.bf16.msra.mxu0 %v468
  %611 = vmatpush.bf16.msra.mxu0 %v467
  %612 = vmatpush.bf16.msra.mxu0 %v466
  %613 = vmatpush.bf16.msra.mxu0 %v465
  %614 = vmatpush.bf16.msra.mxu0 %v464
  %615 = vmatmul.bf16.gmra.mxu0 %v171
  %v616 = vpop.f32.mrf.mxu0
  %v617 = vadd.f32 %v604, %v616
  %v618 = vpop.f32.mrf.mxu0
  %619 = vdwg.mxu0
  %620 = vmatpush.bf16.msra.mxu0 %v479
  %621 = vmatpush.bf16.msra.mxu0 %v478
  %622 = vmatpush.bf16.msra.mxu0 %v477
  %623 = vmatpush.bf16.msra.mxu0 %v476
  %624 = vmatpush.bf16.msra.mxu0 %v475
  %625 = vmatpush.bf16.msra.mxu0 %v474
  %626 = vmatpush.bf16.msra.mxu0 %v473
  %627 = vmatpush.bf16.msra.mxu0 %v472
  %628 = vmatmul.bf16.gmra.mxu0 %v172
  %v629 = vpop.f32.mrf.mxu0
  %v630 = vadd.f32 %v617, %v629
  %v631 = vpop.f32.mrf.mxu0
  %632 = vdwg.mxu0
  %633 = vmatpush.bf16.msra.mxu0 %v487
  %634 = vmatpush.bf16.msra.mxu0 %v486
  %635 = vmatpush.bf16.msra.mxu0 %v485
  %636 = vmatpush.bf16.msra.mxu0 %v484
  %637 = vmatpush.bf16.msra.mxu0 %v483
  %638 = vmatpush.bf16.msra.mxu0 %v482
  %639 = vmatpush.bf16.msra.mxu0 %v481
  %640 = vmatpush.bf16.msra.mxu0 %v480
  %641 = vmatmul.bf16.gmra.mxu0 %v173
  %v642 = vpop.f32.mrf.mxu0
  %v643 = vadd.f32 %v630, %v642
  %v644 = vpop.f32.mrf.mxu0
  %645 = vdwg.mxu0
  %646 = vmatpush.bf16.msra.mxu0 %v495
  %647 = vmatpush.bf16.msra.mxu0 %v494
  %648 = vmatpush.bf16.msra.mxu0 %v493
  %649 = vmatpush.bf16.msra.mxu0 %v492
  %650 = vmatpush.bf16.msra.mxu0 %v491
  %651 = vmatpush.bf16.msra.mxu0 %v490
  %652 = vmatpush.bf16.msra.mxu0 %v489
  %653 = vmatpush.bf16.msra.mxu0 %v488
  %654 = vmatmul.bf16.gmra.mxu0 %v174
  %v655 = vpop.f32.mrf.mxu0
  %v656 = vadd.f32 %v643, %v655
  %v657 = vpop.f32.mrf.mxu0
  %658 = vdwg.mxu0
  %659 = vmatpush.bf16.msra.mxu0 %v503
  %660 = vmatpush.bf16.msra.mxu0 %v502
  %661 = vmatpush.bf16.msra.mxu0 %v501
  %662 = vmatpush.bf16.msra.mxu0 %v500
  %663 = vmatpush.bf16.msra.mxu0 %v499
  %664 = vmatpush.bf16.msra.mxu0 %v498
  %665 = vmatpush.bf16.msra.mxu0 %v497
  %666 = vmatpush.bf16.msra.mxu0 %v496
  %667 = vmatmul.bf16.gmra.mxu0 %v175
  %v668 = vpop.f32.mrf.mxu0
  %v669 = vadd.f32 %v656, %v668
  %v670 = vpop.f32.mrf.mxu0
  %671 = vdwg.mxu0
  %v672 = vmax.f32 %v669, 0.0
  %v673 = vpack.c.bf16 %v672, %v672
  %v674 = vld [vmem:[%s3] sm:$0xf]
  %v675 = vld [vmem:[%s3 + $0x4] sm:$0xf]
  %v676 = vld [vmem:[%s3 + $0x8] sm:$0xf]
  %v677 = vld [vmem:[%s3 + $0xc] sm:$0xf]
  %v678 = vld [vmem:[%s3 + $0x10] sm:$0xf]
  %v679 = vld [vmem:[%s3 + $0x14] sm:$0xf]
  %v680 = vld [vmem:[%s3 + $0x18] sm:$0xf]
  %v681 = vld [vmem:[%s3 + $0x1c] sm:$0xf]
  %v682 = vld [vmem:[%s3 + $0x20] sm:$0xf]
  %v683 = vld [vmem:[%s3 + $0x24] sm:$0xf]
  %v684 = vld [vmem:[%s3 + $0x28] sm:$0xf]
  %v685 = vld [vmem:[%s3 + $0x2c] sm:$0xf]
  %v686 = vld [vmem:[%s3 + $0x30] sm:$0xf]
  %v687 = vld [vmem:[%s3 + $0x34] sm:$0xf]
  %v688 = vld [vmem:[%s3 + $0x38] sm:$0xf]
  %v689 = vld [vmem:[%s3 + $0x3c] sm:$0xf]
  %v690 = vld [vmem:[%s4] sm:$0x1]
  %v692 = vperm.slane %v690, 0
  %v710 = vunpack.c.l.b16 %v674
  %v711 = vunpack.c.l.b16 %v675
  %v712 = vunpack.c.l.b16 %v676
  %v713 = vunpack.c.l.b16 %v677
  %v714 = vunpack.c.l.b16 %v678
  %v715 = vunpack.c.l.b16 %v679
  %v716 = vunpack.c.l.b16 %v680
  %v717 = vunpack.c.l.b16 %v681
  %v718 = vunpack.c.l.b16 %v682
  %v719 = vunpack.c.l.b16 %v683
  %v720 = vunpack.c.l.b16 %v684
  %v721 = vunpack.c.l.b16 %v685
  %v722 = vunpack.c.l.b16 %v686
  %v723 = vunpack.c.l.b16 %v687
  %v724 = vunpack.c.l.b16 %v688
  %v725 = vunpack.c.l.b16 %v689
  %v726 = vpack.c.b16 %v711, %v710
  %v727 = vpack.c.b16 %v713, %v712
  %v728 = vpack.c.b16 %v715, %v714
  %v729 = vpack.c.b16 %v717, %v716
  %v730 = vpack.c.b16 %v719, %v718
  %v731 = vpack.c.b16 %v721, %v720
  %v732 = vpack.c.b16 %v723, %v722
  %v733 = vpack.c.b16 %v725, %v724
  %742 = vmatpush.bf16.msra.mxu0 %v733
  %743 = vmatpush.bf16.msra.mxu0 %v732
  %744 = vmatpush.bf16.msra.mxu0 %v731
  %745 = vmatpush.bf16.msra.mxu0 %v730
  %746 = vmatpush.bf16.msra.mxu0 %v729
  %747 = vmatpush.bf16.msra.mxu0 %v728
  %748 = vmatpush.bf16.msra.mxu0 %v727
  %749 = vmatpush.bf16.msra.mxu0 %v726
  %750 = vmatmul.bf16.gmra.mxu0 %v673
  %v751 = vpop.f32.mrf.mxu0
  %v752 = vadd.f32 %v692, %v751
  %v753 = vpop.f32.mrf.mxu0
  %754 = vdwg.mxu0
  %755 = vst [vmem:[%s5] sm:$0xff] %v752
  // Predicated region
  $region22: #{sequential_forward.1} parent=0 // pred_check
    _
  $region23: #{sequential_forward.1} parent=0 // pred_check_branch
    %757 = sbr.rel (0) target = $region25
  $region24: #{sequential_forward.1} parent=0 // pred_region
    _
  $region25: #{sequential_forward.1} parent=0 // pred_fallthru
    _
  // Predicated region
  $region26: #{sequential_forward.1} parent=0 // pred_check
    _
  $region27: #{sequential_forward.1} parent=0 // pred_check_branch
    %759 = sbr.rel (0) target = $region29
  $region28: #{sequential_forward.1} parent=0 // pred_region
    _
  $region29: #{sequential_forward.1} parent=0 // pred_fallthru
    _

</llo_original>
